<compile_context>
chip_gen: v5e
topology: v5e:2x2
jax: 0.10.0
libtpu: 0.0.40
codegen_flags: <defaults>
</compile_context>

<pallas_src>
import functools

import jax
import jax.numpy as jnp
from jax.experimental import pallas as pl
from jax.experimental.pallas import tpu as pltpu


def _round_up(a, b):
    return -(-a // b) * b


def _vmem_capacity_bytes():
    """Best-effort query of the local chip's VMEM size (fallback: 128 MiB)."""
    try:
        return int(getattr(pltpu.get_tpu_info(), "vmem_capacity_bytes",
                           128 * 1024 * 1024))
    except Exception:  # interpret mode / AOT on CPU / older jax
        return 128 * 1024 * 1024


def _conv_relu_kernel(x_ref, w_ref, b_ref, o_ref, col_ref, *, K, Cp, Wp, Mt):
    # x_ref  : (1, 1, Cp, Bt)  bf16 -- input window for this (n, m) tile
    # w_ref  : (Cout, K*K*Cp)  bf16 -- weights, rows ordered (ki, kj, c_padded)
    # b_ref  : (Cout, 1)       f32
    # o_ref  : (1, Cout, Mt)   out dtype -- Mt multiple of 128 (lane dense)
    # col_ref: (K*K*Cp, Mt)    bf16 -- implicit-im2col VMEM scratch
    #
    # TODO(synk): for deep-Cin layers (Cin >= 128) skip the im2col scratch and
    # use K*K accumulating matmuls (acc += W_kij @ x_window) to cut the K^2x
    # copy traffic through the vector-store slot.
    for ki in range(K):
        for kj in range(K):
            t = ki * K + kj
            off = ki * Wp + kj
            # Static contiguous window; dst rows start at multiples of Cp
            # (>= 16) so these are full bf16 sublane-tile stores.
            col_ref[t * Cp:(t + 1) * Cp, :] = x_ref[0, 0, :, off:off + Mt]

    # Single MXU matmul, contraction depth K*K*Cp, lane-dense output.
    acc = jnp.dot(w_ref[...], col_ref[...],
                  preferred_element_type=jnp.float32)        # (Cout, Mt) f32
    acc = acc + b_ref[...]                                    # (Cout, 1) bcast
    o_ref[0, :, :] = jnp.maximum(acc, 0.0).astype(o_ref.dtype)


def basic_conv2d(x_nchw, weight, bias, *, stride=1, padding=0,
                 out_dtype=jnp.float32, mt=None):
    """Conv2d(stride=1, dilation=1, padding=padding) + ReLU (PyTorch semantics).

    x_nchw : (N, Cin, H, W) float32
    weight : (Cout, Cin, K, K) float32 (PyTorch OIHW)
    bias   : (Cout,) float32
    returns: (N, Cout, Ho, Wo) in `out_dtype` (bf16 available for the
             HBM-writeback-bound layers).
    """
    assert stride == 1, "this kernel implements the stride=1 BasicConv2d path"
    # TODO(synk): GoogLeNet's stem BasicConv2d layers use stride=2; a strided
    # im2col gather is needed for a drop-in replacement of those.
    N, Cin, H, W = x_nchw.shape
    Cout, Cin_w, K, K2 = weight.shape
    assert Cin == Cin_w and K == K2

    Hp, Wp = H + 2 * padding, W + 2 * padding
    Ho, Wo = Hp - K + 1, Wp - K + 1
    assert Ho > 0 and Wo > 0
    Mp = Ho * Wp                       # matmul N-dim (incl. K-1 junk cols/row)
    Cp = _round_up(Cin, 16)            # bf16 sublane packing per kernel tap
    KKCp = K * K * Cp

    # ---- per-generation tile choice --------------------------------------
    vmem_cap = _vmem_capacity_bytes()
    mt_cap = 1024 if vmem_cap >= 96 * 1024 * 1024 else 512   # v5e/v6e vs v7x
    if mt is None:
        mt = max(128, min(mt_cap, _round_up(Mp, 128)))
    assert mt % 128 == 0
    num_m = -(-Mp // mt)
    Mp_pad = num_m * mt
    halo = (K - 1) * (Wp + 1)          # largest tap offset within a tile
    Bt = mt + halo                     # per-tile input window length

    # ---- wrapper-side glue (one pad+convert pass, fused by XLA) ----------
    # Pad channels Cin->Cp, add spatial padding, plus enough zero rows at the
    # bottom so every tile window (including the padded tail tile) is in range.
    Lneed = Mp_pad + halo
    extra = max(0, Lneed - Hp * Wp)
    extra_rows = -(-extra // Wp)
    x_pad = jnp.pad(
        x_nchw,
        ((0, 0), (0, Cp - Cin),
         (padding, padding + extra_rows), (padding, padding)),
    ).astype(jnp.bfloat16)
    x_flat = x_pad.reshape(N, Cp, (Hp + extra_rows) * Wp)
    # Materialise the overlapping per-tile windows (static slices) so the
    # kernel needs no dynamic lane offsets.  Overhead ~ halo/mt of the input.
    x_tiles = jnp.stack([x_flat[:, :, m * mt:m * mt + Bt]
                         for m in range(num_m)], axis=1)   # (N, num_m, Cp, Bt)

    # (Cout, Cin, K, K) -> (Cout, K, K, Cp) -> (Cout, K*K*Cp); padded channel
    # columns are zero, so they contribute nothing on the MXU.
    w_mat = jnp.pad(jnp.transpose(weight, (0, 2, 3, 1)),
                    ((0, 0), (0, 0), (0, 0), (0, Cp - Cin)))
    w_mat = w_mat.reshape(Cout, KKCp).astype(jnp.bfloat16)
    b_col = bias.reshape(Cout, 1).astype(jnp.float32)

    kernel = functools.partial(_conv_relu_kernel, K=K, Cp=Cp, Wp=Wp, Mt=mt)

    out_flat = pl.pallas_call(
        kernel,
        out_shape=jax.ShapeDtypeStruct((N, Cout, Mp_pad), out_dtype),
        grid_spec=pltpu.PrefetchScalarGridSpec(
            num_scalar_prefetch=0,
            grid=(N, num_m),
            in_specs=[
                pl.BlockSpec((1, 1, Cp, Bt), lambda n, m: (n, m, 0, 0)),
                pl.BlockSpec((Cout, KKCp), lambda n, m: (0, 0)),   # resident
                pl.BlockSpec((Cout, 1), lambda n, m: (0, 0)),      # resident
            ],
            out_specs=pl.BlockSpec((1, Cout, mt), lambda n, m: (n, 0, m)),
            scratch_shapes=[pltpu.VMEM((KKCp, mt), jnp.bfloat16)],
        ),
        compiler_params=pltpu.CompilerParams(
            # Both grid axes are independent tiles; the batch axis shards
            # across the two TensorCores on v7x.
            dimension_semantics=("parallel", "parallel"),
            # Budget against the chip's actual VMEM (64 MiB physical on v7x).
            vmem_limit_bytes=min(64 * 1024 * 1024, vmem_cap // 2),
        ),
    )(x_tiles, w_mat, b_col)

    # TODO(synk): a fused consumer should take the (N, Cout, Ho, Wp) padded
    # layout directly and skip this compaction pass over the activations.
    out = out_flat[:, :, :Mp].reshape(N, Cout, Ho, Wp)[:, :, :, :Wo]
    return out


if __name__ == "__main__":
    # Module config: BasicConv2d(in_channels=4, out_channels=8,
    #                            kernel_size=3, padding=1)
    in_channels, out_channels, ksize, pad = 4, 8, 3, 1
    N, H, W = 2, 16, 16

    key = jax.random.PRNGKey(0)
    kx, kw, kb = jax.random.split(key, 3)

    x = jax.random.normal(kx, (N, in_channels, H, W), dtype=jnp.float32)
    fan_in = in_channels * ksize * ksize
    bound = 1.0 / float(fan_in) ** 0.5
    weight = jax.random.uniform(kw, (out_channels, in_channels, ksize, ksize),
                                minval=-bound, maxval=bound, dtype=jnp.float32)
    bias = jax.random.uniform(kb, (out_channels,),
                              minval=-bound, maxval=bound, dtype=jnp.float32)

    out = basic_conv2d(x, weight, bias, padding=pad)
    out = jax.block_until_ready(out)
    assert out.shape == (N, out_channels, H, W)
    assert out.dtype == jnp.float32

    # Tight check vs. a reference using the same bf16 operand quantization as
    # the MXU path (f32 accumulation).
    xq = x.astype(jnp.bfloat16).astype(jnp.float32)
    wq = weight.astype(jnp.bfloat16).astype(jnp.float32)
    ref_bf = jax.lax.conv_general_dilated(
        xq, wq, window_strides=(1, 1),
        padding=((pad, pad), (pad, pad)),
        dimension_numbers=("NCHW", "OIHW", "NCHW"),
        preferred_element_type=jnp.float32)
    ref_bf = jnp.maximum(ref_bf + bias[None, :, None, None], 0.0)
    assert jnp.allclose(out, ref_bf, atol=1e-4, rtol=1e-4), \
        float(jnp.max(jnp.abs(out - ref_bf)))

    # Loose sanity check vs. the full-f32 reference (bf16 rounding tolerance).
    ref32 = jax.lax.conv_general_dilated(
        x, weight, window_strides=(1, 1),
        padding=((pad, pad), (pad, pad)),
        dimension_numbers=("NCHW", "OIHW", "NCHW"))
    ref32 = jnp.maximum(ref32 + bias[None, :, None, None], 0.0)
    assert jnp.allclose(out, ref32, atol=1e-1, rtol=1e-1)

    # bf16-output fast path (halves HBM writeback on memory-bound layers).
    out_bf16 = basic_conv2d(x, weight, bias, padding=pad,
                            out_dtype=jnp.bfloat16)
    out_bf16 = jax.block_until_ready(out_bf16)
    assert out_bf16.dtype == jnp.bfloat16
    assert jnp.allclose(out_bf16.astype(jnp.float32), ref_bf,
                        atol=5e-2, rtol=5e-2)

    print("KERNEL_OK")
</pallas_src>

<mosaic_0001>
module attributes {stable_mosaic.version = 11 : i64} {
  func.func @_conv_relu_kernel(%arg0: i32, %arg1: i32, %arg2: memref<1x1x16x422xbf16, #tpu.memory_space<vmem>>, %arg3: memref<8x144xbf16, #tpu.memory_space<vmem>>, %arg4: memref<8x1xf32, #tpu.memory_space<vmem>>, %arg5: memref<1x8x384xf32, #tpu.memory_space<vmem>>, %arg6: memref<144x384xbf16, #tpu.memory_space<vmem>>) attributes {dimension_semantics = [#tpu.dimension_semantics<parallel>, #tpu.dimension_semantics<parallel>], iteration_bounds = array<i64: 2, 1>, scalar_prefetch = 0 : i64, scratch_operands = 1 : i64, tpu.core_type = #tpu.core_type<tc>, window_params = [{transform_indices = @transform_0, window_bounds = array<i64: 1, 1, 16, 422>}, {pipeline_mode = #tpu.pipeline_mode<synchronous>, transform_indices = @transform_1, window_bounds = array<i64: 8, 144>}, {pipeline_mode = #tpu.pipeline_mode<synchronous>, transform_indices = @transform_2, window_bounds = array<i64: 8, 1>}, {transform_indices = @transform_3, window_bounds = array<i64: 1, 8, 384>}]} {
    %c0 = arith.constant 0 : index
    %c0_0 = arith.constant 0 : index
    %c0_1 = arith.constant 0 : index
    %c0_2 = arith.constant 0 : index
    %0 = vector.load %arg2[%c0, %c0_0, %c0_1, %c0_2] : memref<1x1x16x422xbf16, #tpu.memory_space<vmem>>, vector<1x1x16x384xbf16>
    %1 = vector.shape_cast %0 : vector<1x1x16x384xbf16> to vector<16x384xbf16>
    %c0_3 = arith.constant 0 : index
    %c0_4 = arith.constant 0 : index
    %2 = vector.load %arg6[%c0_3, %c0_4] : memref<144x384xbf16, #tpu.memory_space<vmem>>, vector<16x384xbf16>
    tpu.vector_store %arg6[%c0_3, %c0_4], %1 {strides = array<i32>} : memref<144x384xbf16, #tpu.memory_space<vmem>>, vector<16x384xbf16>,
    %c0_5 = arith.constant 0 : index
    %c0_6 = arith.constant 0 : index
    %c0_7 = arith.constant 0 : index
    %c1 = arith.constant 1 : index
    %3 = vector.load %arg2[%c0_5, %c0_6, %c0_7, %c1] : memref<1x1x16x422xbf16, #tpu.memory_space<vmem>>, vector<1x1x16x384xbf16>
    %4 = vector.shape_cast %3 : vector<1x1x16x384xbf16> to vector<16x384xbf16>
    %c16 = arith.constant 16 : index
    %c0_8 = arith.constant 0 : index
    %5 = vector.load %arg6[%c16, %c0_8] : memref<144x384xbf16, #tpu.memory_space<vmem>>, vector<16x384xbf16>
    tpu.vector_store %arg6[%c16, %c0_8], %4 {strides = array<i32>} : memref<144x384xbf16, #tpu.memory_space<vmem>>, vector<16x384xbf16>,
    %c0_9 = arith.constant 0 : index
    %c0_10 = arith.constant 0 : index
    %c0_11 = arith.constant 0 : index
    %c2 = arith.constant 2 : index
    %6 = vector.load %arg2[%c0_9, %c0_10, %c0_11, %c2] : memref<1x1x16x422xbf16, #tpu.memory_space<vmem>>, vector<1x1x16x384xbf16>
    %7 = vector.shape_cast %6 : vector<1x1x16x384xbf16> to vector<16x384xbf16>
    %c32 = arith.constant 32 : index
    %c0_12 = arith.constant 0 : index
    %8 = vector.load %arg6[%c32, %c0_12] : memref<144x384xbf16, #tpu.memory_space<vmem>>, vector<16x384xbf16>
    tpu.vector_store %arg6[%c32, %c0_12], %7 {strides = array<i32>} : memref<144x384xbf16, #tpu.memory_space<vmem>>, vector<16x384xbf16>,
    %c0_13 = arith.constant 0 : index
    %c0_14 = arith.constant 0 : index
    %c0_15 = arith.constant 0 : index
    %c18 = arith.constant 18 : index
    %9 = vector.load %arg2[%c0_13, %c0_14, %c0_15, %c18] : memref<1x1x16x422xbf16, #tpu.memory_space<vmem>>, vector<1x1x16x384xbf16>
    %10 = vector.shape_cast %9 : vector<1x1x16x384xbf16> to vector<16x384xbf16>
    %c48 = arith.constant 48 : index
    %c0_16 = arith.constant 0 : index
    %11 = vector.load %arg6[%c48, %c0_16] : memref<144x384xbf16, #tpu.memory_space<vmem>>, vector<16x384xbf16>
    tpu.vector_store %arg6[%c48, %c0_16], %10 {strides = array<i32>} : memref<144x384xbf16, #tpu.memory_space<vmem>>, vector<16x384xbf16>,
    %c0_17 = arith.constant 0 : index
    %c0_18 = arith.constant 0 : index
    %c0_19 = arith.constant 0 : index
    %c19 = arith.constant 19 : index
    %12 = vector.load %arg2[%c0_17, %c0_18, %c0_19, %c19] : memref<1x1x16x422xbf16, #tpu.memory_space<vmem>>, vector<1x1x16x384xbf16>
    %13 = vector.shape_cast %12 : vector<1x1x16x384xbf16> to vector<16x384xbf16>
    %c64 = arith.constant 64 : index
    %c0_20 = arith.constant 0 : index
    %14 = vector.load %arg6[%c64, %c0_20] : memref<144x384xbf16, #tpu.memory_space<vmem>>, vector<16x384xbf16>
    tpu.vector_store %arg6[%c64, %c0_20], %13 {strides = array<i32>} : memref<144x384xbf16, #tpu.memory_space<vmem>>, vector<16x384xbf16>,
    %c0_21 = arith.constant 0 : index
    %c0_22 = arith.constant 0 : index
    %c0_23 = arith.constant 0 : index
    %c20 = arith.constant 20 : index
    %15 = vector.load %arg2[%c0_21, %c0_22, %c0_23, %c20] : memref<1x1x16x422xbf16, #tpu.memory_space<vmem>>, vector<1x1x16x384xbf16>
    %16 = vector.shape_cast %15 : vector<1x1x16x384xbf16> to vector<16x384xbf16>
    %c80 = arith.constant 80 : index
    %c0_24 = arith.constant 0 : index
    %17 = vector.load %arg6[%c80, %c0_24] : memref<144x384xbf16, #tpu.memory_space<vmem>>, vector<16x384xbf16>
    tpu.vector_store %arg6[%c80, %c0_24], %16 {strides = array<i32>} : memref<144x384xbf16, #tpu.memory_space<vmem>>, vector<16x384xbf16>,
    %c0_25 = arith.constant 0 : index
    %c0_26 = arith.constant 0 : index
    %c0_27 = arith.constant 0 : index
    %c36 = arith.constant 36 : index
    %18 = vector.load %arg2[%c0_25, %c0_26, %c0_27, %c36] : memref<1x1x16x422xbf16, #tpu.memory_space<vmem>>, vector<1x1x16x384xbf16>
    %19 = vector.shape_cast %18 : vector<1x1x16x384xbf16> to vector<16x384xbf16>
    %c96 = arith.constant 96 : index
    %c0_28 = arith.constant 0 : index
    %20 = vector.load %arg6[%c96, %c0_28] : memref<144x384xbf16, #tpu.memory_space<vmem>>, vector<16x384xbf16>
    tpu.vector_store %arg6[%c96, %c0_28], %19 {strides = array<i32>} : memref<144x384xbf16, #tpu.memory_space<vmem>>, vector<16x384xbf16>,
    %c0_29 = arith.constant 0 : index
    %c0_30 = arith.constant 0 : index
    %c0_31 = arith.constant 0 : index
    %c37 = arith.constant 37 : index
    %21 = vector.load %arg2[%c0_29, %c0_30, %c0_31, %c37] : memref<1x1x16x422xbf16, #tpu.memory_space<vmem>>, vector<1x1x16x384xbf16>
    %22 = vector.shape_cast %21 : vector<1x1x16x384xbf16> to vector<16x384xbf16>
    %c112 = arith.constant 112 : index
    %c0_32 = arith.constant 0 : index
    %23 = vector.load %arg6[%c112, %c0_32] : memref<144x384xbf16, #tpu.memory_space<vmem>>, vector<16x384xbf16>
    tpu.vector_store %arg6[%c112, %c0_32], %22 {strides = array<i32>} : memref<144x384xbf16, #tpu.memory_space<vmem>>, vector<16x384xbf16>,
    %c0_33 = arith.constant 0 : index
    %c0_34 = arith.constant 0 : index
    %c0_35 = arith.constant 0 : index
    %c38 = arith.constant 38 : index
    %24 = vector.load %arg2[%c0_33, %c0_34, %c0_35, %c38] : memref<1x1x16x422xbf16, #tpu.memory_space<vmem>>, vector<1x1x16x384xbf16>
    %25 = vector.shape_cast %24 : vector<1x1x16x384xbf16> to vector<16x384xbf16>
    %c128 = arith.constant 128 : index
    %c0_36 = arith.constant 0 : index
    %26 = vector.load %arg6[%c128, %c0_36] : memref<144x384xbf16, #tpu.memory_space<vmem>>, vector<16x384xbf16>
    tpu.vector_store %arg6[%c128, %c0_36], %25 {strides = array<i32>} : memref<144x384xbf16, #tpu.memory_space<vmem>>, vector<16x384xbf16>,
    %c0_37 = arith.constant 0 : index
    %c0_38 = arith.constant 0 : index
    %27 = vector.load %arg3[%c0_37, %c0_38] : memref<8x144xbf16, #tpu.memory_space<vmem>>, vector<8x144xbf16>
    %c0_39 = arith.constant 0 : index
    %c0_40 = arith.constant 0 : index
    %28 = vector.load %arg6[%c0_39, %c0_40] : memref<144x384xbf16, #tpu.memory_space<vmem>>, vector<144x384xbf16>
    %cst = arith.constant dense<0.000000e+00> : vector<8x384xf32>
    %29 = tpu.matmul %27, %28, %cst {dimension_numbers = #tpu.dot_dimension_numbers<[1], [0], [0], [1], [0, 0, 1, 1], [], []>} : vector<8x144xbf16>, vector<144x384xbf16>, vector<8x384xf32> -> vector<8x384xf32>
    %c0_41 = arith.constant 0 : index
    %c0_42 = arith.constant 0 : index
    %30 = vector.load %arg4[%c0_41, %c0_42] : memref<8x1xf32, #tpu.memory_space<vmem>>, vector<8x1xf32>
    %31 = vector.broadcast %30 : vector<8x1xf32> to vector<8x384xf32>
    %32 = arith.addf %29, %31 : vector<8x384xf32>
    %cst_43 = arith.constant 0.000000e+00 : f32
    %33 = vector.broadcast %cst_43 : f32 to vector<8x384xf32>
    %34 = arith.maximumf %32, %33 : vector<8x384xf32>
    %c0_44 = arith.constant 0 : index
    %c0_45 = arith.constant 0 : index
    %c0_46 = arith.constant 0 : index
    %35 = vector.load %arg5[%c0_44, %c0_45, %c0_46] : memref<1x8x384xf32, #tpu.memory_space<vmem>>, vector<1x8x384xf32>
    %36 = vector.shape_cast %35 : vector<1x8x384xf32> to vector<8x384xf32>
    %37 = vector.shape_cast %34 : vector<8x384xf32> to vector<1x8x384xf32>
    tpu.vector_store %arg5[%c0_44, %c0_45, %c0_46], %37 {strides = array<i32>} : memref<1x8x384xf32, #tpu.memory_space<vmem>>, vector<1x8x384xf32>,
    return
  }
  func.func @transform_0(%arg0: i32, %arg1: i32) -> (i32, i32, i32, i32) {
    %c0_i32 = arith.constant 0 : i32
    %c0_i32_0 = arith.constant 0 : i32
    %c0_i32_1 = arith.constant 0 : i32
    return %arg0, %arg1, %c0_i32, %c0_i32_0 : i32, i32, i32, i32
  }
  func.func @transform_1(%arg0: i32, %arg1: i32) -> (i32, i32) {
    %c0_i32 = arith.constant 0 : i32
    %c0_i32_0 = arith.constant 0 : i32
    %c0_i32_1 = arith.constant 0 : i32
    return %c0_i32, %c0_i32_0 : i32, i32
  }
  func.func @transform_2(%arg0: i32, %arg1: i32) -> (i32, i32) {
    %c0_i32 = arith.constant 0 : i32
    %c0_i32_0 = arith.constant 0 : i32
    %c0_i32_1 = arith.constant 0 : i32
    return %c0_i32, %c0_i32_0 : i32, i32
  }
  func.func @transform_3(%arg0: i32, %arg1: i32) -> (i32, i32, i32) {
    %c0_i32 = arith.constant 0 : i32
    %c0_i32_0 = arith.constant 0 : i32
    return %arg0, %c0_i32, %arg1 : i32, i32, i32
  }
}

</mosaic_0001>

<llo_original>
// kernel: tpu_custom_call.1
$region0: #{tpu_custom_call.1}
  #allocation0 [shape = 'u32[]', space=smem, size = 0x4, offset = 0x4, fixed_abs, tag = 'smem constant byte address 0x4 - core index']
  #allocation1 [shape = 'u32[72,128]{1,0:T(1,128)}', space=vmem, size = 0x9000, scoped, tag = 'internal scratch']
  #allocation2 [shape = 'bf16[144,384]{1,0:T(8,128)(2,1)}', space=vmem, size = 0x1b000, scoped, tag = 'scratch operand']
  %s0 = inlined_call_operand.hbm [shape: bf16[2,1,16,422], index: 0, kind: input, shape index: {}]
  %s1 = inlined_call_operand.vmem [shape: bf16[8,144], index: 1, kind: input, shape index: {}]
  %s2 = inlined_call_operand.vmem [shape: f32[8,1], index: 2, kind: input, shape index: {}]
  %s3 = inlined_call_operand.hbm [shape: f32[2,8,384], index: 3, kind: output, shape index: {}]
  %s4 = sld [smem:[#allocation0]]
  $region49: #{tpu_custom_call.1} parent=0
    _
  %s6 = ssub.s32 1, %s4
  %s7 = scalar_select 0, %s6, %s4
  $region1: #{tpu_custom_call.1} parent=0
    #allocation3 [shape = 'u8[32768]{0}', space=vmem, size = 0x8000, scoped, tag = 'input window, operand 0']
    #allocation4 [shape = 's32[2]{0}', space=sflag, size = 0x8, scoped, tag = 'scoped memory for tpu_custom_call.1']
    #allocation5 [shape = 's32[2]{0}', space=sflag, size = 0x8, scoped, tag = 'scoped memory for tpu_custom_call.1']
    #allocation6 [shape = 'u8[24576]{0}', space=vmem, size = 0x6000, scoped, tag = 'output window, operand 0']
    %8 = vsyncpa [#allocation4], 0
    %s9 = scalar_lea.sflag [#allocation4], 1
    %10 = vsyncpa %s9, 0
    %11 = vsyncpa [#allocation5], 0
    %s12 = scalar_lea.sflag [#allocation5], 1
    %13 = vsyncpa %s12, 0
    loop: start=0, step=1, limit=4
    $region2: #{tpu_custom_call.1} parent=1 // loop_pre_header
      _
    $region3: #{tpu_custom_call.1} parent=1 // loop_header
      %s15 = sphi 0, %s19
      %p16 = scmp.ge.s32.totalorder %s15, 4
      %s22 = sphi 0, %s34
      %s23 = sphi 0, %s30
      %s24 = sphi 0, %s22
      %s25 = sphi 0, %s23
      %s26 = sphi 0, %s24
      %s27 = sphi 0, %s25
      %s39 = sphi 0, %s41
      %s42 = sphi 0, %s39
      %s43 = sphi 0, %s42
      %s59 = sphi 0, %s43
      %s63 = sphi 0, %s63
      %s65 = sphi 0, %s63
      %s66 = sphi 0, %s65
      %s80 = sphi 0, %s66
      %s84 = sphi 0, %s84
      %s86 = sphi 0, %s84
      %s87 = sphi 0, %s86
      %s101 = sphi 0, %s87
      %s109 = sphi 0, %s111
      %s112 = sphi 0, %s109
      %s113 = sphi 0, %s112
      %s129 = sphi 0, %s113
    $region4: #{tpu_custom_call.1} parent=1 // loop_header_branch
      %18 = sbr.rel (%p16) target = $region8
    $region5: #{tpu_custom_call.1} parent=1 // loop_body
      %s20 = ssub.s32 %s15, 1
      %s21 = ssub.s32 %s15, 2
      %s28 = sadd.s32 1, %s23
      %p29 = scmp.ge.s32.totalorder %s28, 1
      %s30 = scalar_select %p29, 0, %s28
      %s31 = sadd.s32 1, %s22
      %s32 = scalar_select %p29, %s31, %s22
      %p33 = scmp.ge.s32.totalorder %s32, 2
      %s34 = scalar_select %p33, 0, %s32
      %s35 = ssub.s32 %s22, %s34
      %s36 = ssub.s32 %s23, %s30
      %s37 = sor.u32 %s35, %s36
      %p38 = scmp.eq.s32.totalorder %s37, 0
      %s40 = sadd.s32 %s39, 1
      %s41 = scalar_select %p38, %s39, %s40
      %p44 = pneg %p38
      %p45 = scmp.eq.s32.totalorder %s15, 1
      %p46 = por %p44, %p45
      %p47 = scmp.ne.s32.totalorder %s39, %s42
      %p48 = scmp.eq.s32.totalorder %s15, 0
      %p49 = por %p47, %p48
      %p50 = scmp.ne.s32.totalorder %s39, %s42
      %p51 = scmp.eq.s32.totalorder %s20, 1
      %p52 = por %p50, %p51
      %p53 = scmp.ne.s32.totalorder %s42, %s43
      %p54 = scmp.eq.s32.totalorder %s20, 0
      %p55 = por %p53, %p54
      %p56 = scmp.ne.s32.totalorder %s42, %s43
      %p57 = scmp.eq.s32.totalorder %s21, 1
      %p58 = por %p56, %p57
      %p60 = scmp.ne.s32.totalorder %s43, %s59
      %p61 = scmp.eq.s32.totalorder %s21, 0
      %p62 = por %p60, %p61
      %s64 = sadd.s32 %s63, 1
      %p67 = scmp.eq.s32.totalorder %s15, 1
      %p68 = scmp.ne.s32.totalorder %s63, %s65
      %p69 = scmp.eq.s32.totalorder %s15, 0
      %p70 = por %p68, %p69
      %p71 = scmp.ne.s32.totalorder %s63, %s65
      %p72 = scmp.eq.s32.totalorder %s20, 1
      %p73 = por %p71, %p72
      %p74 = scmp.ne.s32.totalorder %s65, %s66
      %p75 = scmp.eq.s32.totalorder %s20, 0
      %p76 = por %p74, %p75
      %p77 = scmp.ne.s32.totalorder %s65, %s66
      %p78 = scmp.eq.s32.totalorder %s21, 1
      %p79 = por %p77, %p78
      %p81 = scmp.ne.s32.totalorder %s66, %s80
      %p82 = scmp.eq.s32.totalorder %s21, 0
      %p83 = por %p81, %p82
      %s85 = sadd.s32 %s84, 1
      %p88 = scmp.eq.s32.totalorder %s15, 1
      %p89 = scmp.ne.s32.totalorder %s84, %s86
      %p90 = scmp.eq.s32.totalorder %s15, 0
      %p91 = por %p89, %p90
      %p92 = scmp.ne.s32.totalorder %s84, %s86
      %p93 = scmp.eq.s32.totalorder %s20, 1
      %p94 = por %p92, %p93
      %p95 = scmp.ne.s32.totalorder %s86, %s87
      %p96 = scmp.eq.s32.totalorder %s20, 0
      %p97 = por %p95, %p96
      %p98 = scmp.ne.s32.totalorder %s86, %s87
      %p99 = scmp.eq.s32.totalorder %s21, 1
      %p100 = por %p98, %p99
      %p102 = scmp.ne.s32.totalorder %s87, %s101
      %p103 = scmp.eq.s32.totalorder %s21, 0
      %p104 = por %p102, %p103
      %s105 = ssub.s32 %s22, %s34
      %s106 = ssub.s32 %s23, %s30
      %s107 = sor.u32 %s105, %s106
      %p108 = scmp.eq.s32.totalorder %s107, 0
      %s110 = sadd.s32 %s109, 1
      %s111 = scalar_select %p108, %s109, %s110
      %p114 = pneg %p108
      %p115 = scmp.eq.s32.totalorder %s15, 1
      %p116 = por %p114, %p115
      %p117 = scmp.ne.s32.totalorder %s109, %s112
      %p118 = scmp.eq.s32.totalorder %s15, 0
      %p119 = por %p117, %p118
      %p120 = scmp.ne.s32.totalorder %s109, %s112
      %p121 = scmp.eq.s32.totalorder %s20, 1
      %p122 = por %p120, %p121
      %p123 = scmp.ne.s32.totalorder %s112, %s113
      %p124 = scmp.eq.s32.totalorder %s20, 0
      %p125 = por %p123, %p124
      %p126 = scmp.ne.s32.totalorder %s112, %s113
      %p127 = scmp.eq.s32.totalorder %s21, 1
      %p128 = por %p126, %p127
      %p130 = scmp.ne.s32.totalorder %s113, %s129
      %p131 = scmp.eq.s32.totalorder %s21, 0
      %p132 = por %p130, %p131
      %p133 = scmp.le.s32.totalorder 1, %s15
      %p134 = scmp.lt.s32.totalorder %s15, 3
      %p135 = pnand %p133, %p134
      %p136 = pneg %p135
      // Predicated region
      $region9: #{tpu_custom_call.1} parent=5 // pred_check
        _
      $region10: #{tpu_custom_call.1} parent=5 // pred_check_branch
        %138 = sbr.rel (%p135) target = $region12
      $region11: #{tpu_custom_call.1} parent=5 // pred_region
        %s139 = ssub.s32 %s15, 1
        // Predicated region
        $region13: #{tpu_custom_call.1} parent=11 // pred_check
          %p140 = pneg %p76
        $region14: #{tpu_custom_call.1} parent=11 // pred_check_branch
          %142 = sbr.rel (%p140) target = $region16
        $region15: #{tpu_custom_call.1} parent=11 // pred_region
          _
        $region16: #{tpu_custom_call.1} parent=11 // pred_fallthru
          _
        // Predicated region
        $region17: #{tpu_custom_call.1} parent=11 // pred_check
          %p143 = pneg %p97
        $region18: #{tpu_custom_call.1} parent=11 // pred_check_branch
          %145 = sbr.rel (%p143) target = $region20
        $region19: #{tpu_custom_call.1} parent=11 // pred_region
          _
        $region20: #{tpu_custom_call.1} parent=11 // pred_fallthru
          _
      $region12: #{tpu_custom_call.1} parent=5 // pred_fallthru
        _
      %p146 = scmp.lt.s32.totalorder %s15, 2
      // Predicated region
      $region21: #{tpu_custom_call.1} parent=5 // pred_check
        %p147 = pneg %p146
      $region22: #{tpu_custom_call.1} parent=5 // pred_check_branch
        %149 = sbr.rel (%p147) target = $region24
      $region23: #{tpu_custom_call.1} parent=5 // pred_region
        // Predicated region
        $region25: #{tpu_custom_call.1} parent=23 // pred_check
          %p150 = pneg %p49
        $region26: #{tpu_custom_call.1} parent=23 // pred_check_branch
          %152 = sbr.rel (%p150) target = $region28
        $region27: #{tpu_custom_call.1} parent=23 // pred_region
          %s153 = sand.u32 %s39, 1
          %s154 = scalar_lea.sflag [#allocation4], %s153
          %s155 = sand.u32 %s39, 1
          %s156 = smul.addr %s155, 32
          %s157 = scalar_lea.vmem [#allocation3], %s156
          %159 = vsyncadd %s154, 0
          %s160 = smul.addr %s23, 8
          %s161 = smul.addr %s22, 8
          %s162 = sadd.s32 %s160, %s161
          %s163 = smul.addr %s162, 4
          %s164 = scalar_lea.hbm %s0, %s163
          %s165 = sshll.u32 %s164, 4
          %s166 = int_to_ptr.hbm [resolvable:$true] %s165
          %s167 = sshll.u32 %s157, 4
          %s168 = int_to_ptr.vmem [resolvable:$true] %s167
          %173 = dma.hbm_to_vmem [thread:$0]  %s166, 512, %s168, %s154, 256, 256, 16
        $region28: #{tpu_custom_call.1} parent=23 // pred_fallthru
          _
      $region24: #{tpu_custom_call.1} parent=5 // pred_fallthru
        _
      %p174 = scmp.le.s32.totalorder 1, %s15
      %p175 = scmp.lt.s32.totalorder %s15, 3
      %p176 = pnand %p174, %p175
      %p177 = pneg %p176
      // Predicated region
      $region29: #{tpu_custom_call.1} parent=5 // pred_check
        _
      $region30: #{tpu_custom_call.1} parent=5 // pred_check_branch
        %179 = sbr.rel (%p176) target = $region32
      $region31: #{tpu_custom_call.1} parent=5 // pred_region
        %s180 = ssub.s32 %s15, 1
        %s181 = sand.u32 %s42, 1
        %s182 = scalar_lea.sflag [#allocation4], %s181
        %s183 = sand.u32 %s42, 1
        %s184 = smul.addr %s183, 32
        %s185 = scalar_lea.vmem [#allocation3], %s184
        // Predicated region
        $region33: #{tpu_custom_call.1} parent=31 // pred_check
          %p186 = pneg %p55
        $region34: #{tpu_custom_call.1} parent=31 // pred_check_branch
          %188 = sbr.rel (%p186) target = $region36
        $region35: #{tpu_custom_call.1} parent=31 // pred_region
          %190 = dma.done %s182, 512
        $region36: #{tpu_custom_call.1} parent=31 // pred_fallthru
          _
        %s191 = sand.u32 %s42, 1
        %s192 = scalar_lea.sflag [#allocation4], %s191
        %s193 = sand.u32 %s42, 1
        %s194 = smul.addr %s193, 32
        %s195 = scalar_lea.vmem [#allocation3], %s194
        %p196 = pneg %p55
        %p197 = pneg %p52
        %p198 = pneg %p76
        %p199 = pneg %p73
        %p200 = pneg %p97
        %p201 = pneg %p94
        %p202 = pneg %p125
        %p203 = pneg %p122
        %s204 = sand.u32 %s112, 1
        %s205 = scalar_lea.sflag [#allocation5], %s204
        %s206 = sand.u32 %s112, 1
        %s207 = smul.addr %s206, 24
        %s208 = scalar_lea.vmem [#allocation6], %s207
        %s209 = smul.u32 3, %s25
        %v211 = vld [vmem:[%s185] sm:$0xff]
        %v212 = vld [vmem:[%s185 + $0x8] sm:$0xf]
        %v213 = vld [vmem:[%s185 + $0x10] sm:$0xff]
        %v214 = vld [vmem:[%s185 + $0x18] sm:$0xf]
        %215 = vst [vmem:[#allocation2] sm:$0xff] %v211
        %216 = vst [vmem:[#allocation2 + $0x8] sm:$0xf] %v212
        %217 = vst [vmem:[#allocation2 + $0xc] sm:$0xff] %v213
        %218 = vst [vmem:[#allocation2 + $0x14] sm:$0xf] %v214
        %v219 = vld [vmem:[%s185] sm:$0xff]
        %v220 = vld [vmem:[%s185 + $0x8] sm:$0xff]
        %v221 = vld [vmem:[%s185 + $0x10] sm:$0xff]
        %v222 = vld [vmem:[%s185 + $0x18] sm:$0xff]
        %227 = vrot.lane.b32.xlu0 %v219, 127
        %v228 = vpop.permute.xlu0 %227
        %229 = vrot.lane.b32.xlu0 %v220, 127
        %v230 = vpop.permute.xlu0 %229
        %231 = vrot.lane.b32.xlu0 %v221, 127
        %v232 = vpop.permute.xlu0 %231
        %233 = vrot.lane.b32.xlu0 %v222, 127
        %v234 = vpop.permute.xlu0 %233
        %v235 = vrot.slane %v228, 4
        %v236 = vrot.slane %v230, 4
        %v237 = vrot.slane %v232, 4
        %v238 = vrot.slane %v234, 4
        %vm239 = vcmask 1043456
        %v240 = vsel %vm239, %v235, %v236
        %vm241 = vcmask 1039360
        %v242 = vsel %vm241, %v228, %v240
        %v243 = vsel %vm241, %v230, %v236
        %v244 = vsel %vm239, %v237, %v238
        %v245 = vsel %vm241, %v232, %v244
        %v246 = vsel %vm241, %v234, %v238
        %251 = vst [vmem:[#allocation2 + $0x18] sm:$0xff] %v242
        %252 = vst [vmem:[#allocation2 + $0x20] sm:$0xf] %v243
        %253 = vst [vmem:[#allocation2 + $0x24] sm:$0xff] %v245
        %254 = vst [vmem:[#allocation2 + $0x2c] sm:$0xf] %v246
        %v255 = vld [vmem:[%s185] sm:$0xff]
        %v256 = vld [vmem:[%s185 + $0x8] sm:$0xff]
        %v257 = vld [vmem:[%s185 + $0x10] sm:$0xff]
        %v258 = vld [vmem:[%s185 + $0x18] sm:$0xff]
        %263 = vrot.lane.b32.xlu0 %v255, 126
        %v264 = vpop.permute.xlu0 %263
        %265 = vrot.lane.b32.xlu0 %v256, 126
        %v266 = vpop.permute.xlu0 %265
        %267 = vrot.lane.b32.xlu0 %v257, 126
        %v268 = vpop.permute.xlu0 %267
        %269 = vrot.lane.b32.xlu0 %v258, 126
        %v270 = vpop.permute.xlu0 %269
        %v271 = vrot.slane %v264, 4
        %v272 = vrot.slane %v266, 4
        %v273 = vrot.slane %v268, 4
        %v274 = vrot.slane %v270, 4
        %v275 = vsel %vm239, %v271, %v272
        %vm276 = vcmask 1031168
        %v277 = vsel %vm276, %v264, %v275
        %v278 = vsel %vm276, %v266, %v272
        %v279 = vsel %vm239, %v273, %v274
        %v280 = vsel %vm276, %v268, %v279
        %v281 = vsel %vm276, %v270, %v274
        %286 = vst [vmem:[#allocation2 + $0x30] sm:$0xff] %v277
        %287 = vst [vmem:[#allocation2 + $0x38] sm:$0xf] %v278
        %288 = vst [vmem:[#allocation2 + $0x3c] sm:$0xff] %v280
        %289 = vst [vmem:[#allocation2 + $0x44] sm:$0xf] %v281
        %v290 = vld [vmem:[%s185] sm:$0xff]
        %v291 = vld [vmem:[%s185 + $0x8] sm:$0xff]
        %v292 = vld [vmem:[%s185 + $0x10] sm:$0xff]
        %v293 = vld [vmem:[%s185 + $0x18] sm:$0xff]
        %298 = vrot.lane.b32.xlu0 %v290, 110
        %v299 = vpop.permute.xlu0 %298
        %300 = vrot.lane.b32.xlu0 %v291, 110
        %v301 = vpop.permute.xlu0 %300
        %302 = vrot.lane.b32.xlu0 %v292, 110
        %v303 = vpop.permute.xlu0 %302
        %304 = vrot.lane.b32.xlu0 %v293, 110
        %v305 = vpop.permute.xlu0 %304
        %v306 = vrot.slane %v299, 4
        %v307 = vrot.slane %v301, 4
        %v308 = vrot.slane %v303, 4
        %v309 = vrot.slane %v305, 4
        %v310 = vsel %vm239, %v306, %v307
        %vm311 = vcmask 900096
        %v312 = vsel %vm311, %v299, %v310
        %v313 = vsel %vm311, %v301, %v307
        %v314 = vsel %vm239, %v308, %v309
        %v315 = vsel %vm311, %v303, %v314
        %v316 = vsel %vm311, %v305, %v309
        %321 = vst [vmem:[#allocation2 + $0x48] sm:$0xff] %v312
        %322 = vst [vmem:[#allocation2 + $0x50] sm:$0xf] %v313
        %323 = vst [vmem:[#allocation2 + $0x54] sm:$0xff] %v315
        %324 = vst [vmem:[#allocation2 + $0x5c] sm:$0xf] %v316
        %v325 = vld [vmem:[%s185] sm:$0xff]
        %v326 = vld [vmem:[%s185 + $0x8] sm:$0xff]
        %v327 = vld [vmem:[%s185 + $0x10] sm:$0xff]
        %v328 = vld [vmem:[%s185 + $0x18] sm:$0xff]
        %333 = vrot.lane.b32.xlu0 %v325, 109
        %v334 = vpop.permute.xlu0 %333
        %335 = vrot.lane.b32.xlu0 %v326, 109
        %v336 = vpop.permute.xlu0 %335
        %337 = vrot.lane.b32.xlu0 %v327, 109
        %v338 = vpop.permute.xlu0 %337
        %339 = vrot.lane.b32.xlu0 %v328, 109
        %v340 = vpop.permute.xlu0 %339
        %v341 = vrot.slane %v334, 4
        %v342 = vrot.slane %v336, 4
        %v343 = vrot.slane %v338, 4
        %v344 = vrot.slane %v340, 4
        %v345 = vsel %vm239, %v341, %v342
        %vm346 = vcmask 891904
        %v347 = vsel %vm346, %v334, %v345
        %v348 = vsel %vm346, %v336, %v342
        %v349 = vsel %vm239, %v343, %v344
        %v350 = vsel %vm346, %v338, %v349
        %v351 = vsel %vm346, %v340, %v344
        %356 = vst [vmem:[#allocation2 + $0x60] sm:$0xff] %v347
        %357 = vst [vmem:[#allocation2 + $0x68] sm:$0xf] %v348
        %358 = vst [vmem:[#allocation2 + $0x6c] sm:$0xff] %v350
        %359 = vst [vmem:[#allocation2 + $0x74] sm:$0xf] %v351
        %v360 = vld [vmem:[%s185] sm:$0xff]
        %v361 = vld [vmem:[%s185 + $0x8] sm:$0xff]
        %v362 = vld [vmem:[%s185 + $0x10] sm:$0xff]
        %v363 = vld [vmem:[%s185 + $0x18] sm:$0xff]
        %368 = vrot.lane.b32.xlu0 %v360, 108
        %v369 = vpop.permute.xlu0 %368
        %370 = vrot.lane.b32.xlu0 %v361, 108
        %v371 = vpop.permute.xlu0 %370
        %372 = vrot.lane.b32.xlu0 %v362, 108
        %v373 = vpop.permute.xlu0 %372
        %374 = vrot.lane.b32.xlu0 %v363, 108
        %v375 = vpop.permute.xlu0 %374
        %v376 = vrot.slane %v369, 4
        %v377 = vrot.slane %v371, 4
        %v378 = vrot.slane %v373, 4
        %v379 = vrot.slane %v375, 4
        %v380 = vsel %vm239, %v376, %v377
        %vm381 = vcmask 883712
        %v382 = vsel %vm381, %v369, %v380
        %v383 = vsel %vm381, %v371, %v377
        %v384 = vsel %vm239, %v378, %v379
        %v385 = vsel %vm381, %v373, %v384
        %v386 = vsel %vm381, %v375, %v379
        %391 = vst [vmem:[#allocation2 + $0x78] sm:$0xff] %v382
        %392 = vst [vmem:[#allocation2 + $0x80] sm:$0xf] %v383
        %393 = vst [vmem:[#allocation2 + $0x84] sm:$0xff] %v385
        %394 = vst [vmem:[#allocation2 + $0x8c] sm:$0xf] %v386
        %v395 = vld [vmem:[%s185] sm:$0xff]
        %v396 = vld [vmem:[%s185 + $0x8] sm:$0xff]
        %v397 = vld [vmem:[%s185 + $0x10] sm:$0xff]
        %v398 = vld [vmem:[%s185 + $0x18] sm:$0xff]
        %403 = vrot.lane.b32.xlu0 %v395, 92
        %v404 = vpop.permute.xlu0 %403
        %405 = vrot.lane.b32.xlu0 %v396, 92
        %v406 = vpop.permute.xlu0 %405
        %407 = vrot.lane.b32.xlu0 %v397, 92
        %v408 = vpop.permute.xlu0 %407
        %409 = vrot.lane.b32.xlu0 %v398, 92
        %v410 = vpop.permute.xlu0 %409
        %v411 = vrot.slane %v404, 4
        %v412 = vrot.slane %v406, 4
        %v413 = vrot.slane %v408, 4
        %v414 = vrot.slane %v410, 4
        %v415 = vsel %vm239, %v411, %v412
        %vm416 = vcmask 752640
        %v417 = vsel %vm416, %v404, %v415
        %v418 = vsel %vm416, %v406, %v412
        %v419 = vsel %vm239, %v413, %v414
        %v420 = vsel %vm416, %v408, %v419
        %v421 = vsel %vm416, %v410, %v414
        %426 = vst [vmem:[#allocation2 + $0x90] sm:$0xff] %v417
        %427 = vst [vmem:[#allocation2 + $0x98] sm:$0xf] %v418
        %428 = vst [vmem:[#allocation2 + $0x9c] sm:$0xff] %v420
        %429 = vst [vmem:[#allocation2 + $0xa4] sm:$0xf] %v421
        %v430 = vld [vmem:[%s185] sm:$0xff]
        %v431 = vld [vmem:[%s185 + $0x8] sm:$0xff]
        %v432 = vld [vmem:[%s185 + $0x10] sm:$0xff]
        %v433 = vld [vmem:[%s185 + $0x18] sm:$0xff]
        %438 = vrot.lane.b32.xlu0 %v430, 91
        %v439 = vpop.permute.xlu0 %438
        %440 = vrot.lane.b32.xlu0 %v431, 91
        %v441 = vpop.permute.xlu0 %440
        %442 = vrot.lane.b32.xlu0 %v432, 91
        %v443 = vpop.permute.xlu0 %442
        %444 = vrot.lane.b32.xlu0 %v433, 91
        %v445 = vpop.permute.xlu0 %444
        %v446 = vrot.slane %v439, 4
        %v447 = vrot.slane %v441, 4
        %v448 = vrot.slane %v443, 4
        %v449 = vrot.slane %v445, 4
        %v450 = vsel %vm239, %v446, %v447
        %vm451 = vcmask 744448
        %v452 = vsel %vm451, %v439, %v450
        %v453 = vsel %vm451, %v441, %v447
        %v454 = vsel %vm239, %v448, %v449
        %v455 = vsel %vm451, %v443, %v454
        %v456 = vsel %vm451, %v445, %v449
        %461 = vst [vmem:[#allocation2 + $0xa8] sm:$0xff] %v452
        %462 = vst [vmem:[#allocation2 + $0xb0] sm:$0xf] %v453
        %463 = vst [vmem:[#allocation2 + $0xb4] sm:$0xff] %v455
        %464 = vst [vmem:[#allocation2 + $0xbc] sm:$0xf] %v456
        %v465 = vld [vmem:[%s185] sm:$0xff]
        %v466 = vld [vmem:[%s185 + $0x8] sm:$0xff]
        %v467 = vld [vmem:[%s185 + $0x10] sm:$0xff]
        %v468 = vld [vmem:[%s185 + $0x18] sm:$0xff]
        %473 = vrot.lane.b32.xlu0 %v465, 90
        %v474 = vpop.permute.xlu0 %473
        %475 = vrot.lane.b32.xlu0 %v466, 90
        %v476 = vpop.permute.xlu0 %475
        %477 = vrot.lane.b32.xlu0 %v467, 90
        %v478 = vpop.permute.xlu0 %477
        %479 = vrot.lane.b32.xlu0 %v468, 90
        %v480 = vpop.permute.xlu0 %479
        %v481 = vrot.slane %v474, 4
        %v482 = vrot.slane %v476, 4
        %v483 = vrot.slane %v478, 4
        %v484 = vrot.slane %v480, 4
        %v485 = vsel %vm239, %v481, %v482
        %vm486 = vcmask 736256
        %v487 = vsel %vm486, %v474, %v485
        %v488 = vsel %vm486, %v476, %v482
        %v489 = vsel %vm239, %v483, %v484
        %v490 = vsel %vm486, %v478, %v489
        %v491 = vsel %vm486, %v480, %v484
        %496 = vst [vmem:[#allocation2 + $0xc0] sm:$0xff] %v487
        %497 = vst [vmem:[#allocation2 + $0xc8] sm:$0xf] %v488
        %498 = vst [vmem:[#allocation2 + $0xcc] sm:$0xff] %v490
        %499 = vst [vmem:[#allocation2 + $0xd4] sm:$0xf] %v491
        %v500 = vld [vmem:[%s1] sm:$0xff]
        %v501 = vld [vmem:[#allocation2] sm:$0xff]
        %v502 = vld [vmem:[#allocation2 + $0x8] sm:$0xf]
        %v503 = vld [vmem:[#allocation2 + $0xc] sm:$0xff]
        %v504 = vld [vmem:[#allocation2 + $0x14] sm:$0xf]
        %v505 = vld [vmem:[#allocation2 + $0x18] sm:$0xff]
        %v506 = vld [vmem:[#allocation2 + $0x20] sm:$0xf]
        %v507 = vld [vmem:[#allocation2 + $0x24] sm:$0xff]
        %v508 = vld [vmem:[#allocation2 + $0x2c] sm:$0xf]
        %v509 = vld [vmem:[#allocation2 + $0x30] sm:$0xff]
        %v510 = vld [vmem:[#allocation2 + $0x38] sm:$0xf]
        %v511 = vld [vmem:[#allocation2 + $0x3c] sm:$0xff]
        %v512 = vld [vmem:[#allocation2 + $0x44] sm:$0xf]
        %v513 = vld [vmem:[#allocation2 + $0x48] sm:$0xff]
        %v514 = vld [vmem:[#allocation2 + $0x50] sm:$0xf]
        %v515 = vld [vmem:[#allocation2 + $0x54] sm:$0xff]
        %v516 = vld [vmem:[#allocation2 + $0x5c] sm:$0xf]
        %v517 = vld [vmem:[#allocation2 + $0x60] sm:$0xff]
        %v518 = vld [vmem:[#allocation2 + $0x68] sm:$0xf]
        %v519 = vld [vmem:[#allocation2 + $0x6c] sm:$0xff]
        %v520 = vld [vmem:[#allocation2 + $0x74] sm:$0xf]
        %v521 = vld [vmem:[#allocation2 + $0x78] sm:$0xff]
        %v522 = vld [vmem:[#allocation2 + $0x80] sm:$0xf]
        %v523 = vld [vmem:[#allocation2 + $0x84] sm:$0xff]
        %v524 = vld [vmem:[#allocation2 + $0x8c] sm:$0xf]
        %v525 = vld [vmem:[#allocation2 + $0x90] sm:$0xff]
        %v526 = vld [vmem:[#allocation2 + $0x98] sm:$0xf]
        %v527 = vld [vmem:[#allocation2 + $0x9c] sm:$0xff]
        %v528 = vld [vmem:[#allocation2 + $0xa4] sm:$0xf]
        %v529 = vld [vmem:[#allocation2 + $0xa8] sm:$0xff]
        %v530 = vld [vmem:[#allocation2 + $0xb0] sm:$0xf]
        %v531 = vld [vmem:[#allocation2 + $0xb4] sm:$0xff]
        %v532 = vld [vmem:[#allocation2 + $0xbc] sm:$0xf]
        %v533 = vld [vmem:[#allocation2 + $0xc0] sm:$0xff]
        %v534 = vld [vmem:[#allocation2 + $0xc8] sm:$0xf]
        %v535 = vld [vmem:[#allocation2 + $0xcc] sm:$0xff]
        %v536 = vld [vmem:[#allocation2 + $0xd4] sm:$0xf]
        %v537 = vld [vmem:[%s2] sm:$0xff]
        %539 = vset.pattern.permute.xlu0 0
        %540 = vperm.xlu0 %539, %v537
        %v541 = vpop.permute.xlu0 %540
        %v544 = vunpack.c.l.b16 %v500
        %v545 = vunpack.c.h.b16 %v500
        %v546 = vpack.c.b16 %v544, %v544
        %v547 = vpack.c.b16 %v545, %v545
        %v585 = vunpack.c.l.b16 %v501
        %v586 = vunpack.c.h.b16 %v501
        %v587 = vunpack.c.l.b16 %v502
        %v588 = vunpack.c.l.b16 %v503
        %v589 = vunpack.c.h.b16 %v503
        %v590 = vunpack.c.l.b16 %v504
        %v591 = vunpack.c.l.b16 %v505
        %v592 = vunpack.c.h.b16 %v505
        %v593 = vunpack.c.l.b16 %v506
        %v594 = vunpack.c.l.b16 %v507
        %v595 = vunpack.c.h.b16 %v507
        %v596 = vunpack.c.l.b16 %v508
        %v597 = vunpack.c.l.b16 %v509
        %v598 = vunpack.c.h.b16 %v509
        %v599 = vunpack.c.l.b16 %v510
        %v600 = vunpack.c.l.b16 %v511
        %v601 = vunpack.c.h.b16 %v511
        %v602 = vunpack.c.l.b16 %v512
        %v603 = vunpack.c.l.b16 %v513
        %v604 = vunpack.c.h.b16 %v513
        %v605 = vunpack.c.l.b16 %v514
        %v606 = vunpack.c.l.b16 %v515
        %v607 = vunpack.c.h.b16 %v515
        %v608 = vunpack.c.l.b16 %v516
        %v609 = vunpack.c.l.b16 %v517
        %v610 = vunpack.c.h.b16 %v517
        %v611 = vunpack.c.l.b16 %v518
        %v612 = vunpack.c.l.b16 %v519
        %v613 = vunpack.c.h.b16 %v519
        %v614 = vunpack.c.l.b16 %v520
        %v615 = vunpack.c.l.b16 %v521
        %v616 = vunpack.c.h.b16 %v521
        %v617 = vunpack.c.l.b16 %v522
        %v618 = vunpack.c.l.b16 %v523
        %v619 = vunpack.c.h.b16 %v523
        %v620 = vunpack.c.l.b16 %v524
        %v621 = vunpack.c.l.b16 %v525
        %v622 = vunpack.c.h.b16 %v525
        %v623 = vunpack.c.l.b16 %v526
        %v624 = vunpack.c.l.b16 %v527
        %v625 = vunpack.c.h.b16 %v527
        %v626 = vunpack.c.l.b16 %v528
        %v627 = vunpack.c.l.b16 %v529
        %v628 = vunpack.c.h.b16 %v529
        %v629 = vunpack.c.l.b16 %v530
        %v630 = vunpack.c.l.b16 %v531
        %v631 = vunpack.c.h.b16 %v531
        %v632 = vunpack.c.l.b16 %v532
        %v633 = vunpack.c.l.b16 %v533
        %v634 = vunpack.c.h.b16 %v533
        %v635 = vunpack.c.l.b16 %v534
        %v636 = vunpack.c.l.b16 %v535
        %v637 = vunpack.c.h.b16 %v535
        %v638 = vunpack.c.l.b16 %v536
        %v639 = vpack.c.b16 %v588, %v585
        %v640 = vpack.c.b16 %v589, %v586
        %v641 = vpack.c.b16 %v590, %v587
        %v642 = vpack.c.b16 %v594, %v591
        %v643 = vpack.c.b16 %v595, %v592
        %v644 = vpack.c.b16 %v596, %v593
        %v645 = vpack.c.b16 %v600, %v597
        %v646 = vpack.c.b16 %v601, %v598
        %v647 = vpack.c.b16 %v602, %v599
        %v648 = vpack.c.b16 %v606, %v603
        %v649 = vpack.c.b16 %v607, %v604
        %v650 = vpack.c.b16 %v608, %v605
        %v651 = vpack.c.b16 %v612, %v609
        %v652 = vpack.c.b16 %v613, %v610
        %v653 = vpack.c.b16 %v614, %v611
        %v654 = vpack.c.b16 %v618, %v615
        %v655 = vpack.c.b16 %v619, %v616
        %v656 = vpack.c.b16 %v620, %v617
        %v657 = vpack.c.b16 %v624, %v621
        %v658 = vpack.c.b16 %v625, %v622
        %v659 = vpack.c.b16 %v626, %v623
        %v660 = vpack.c.b16 %v630, %v627
        %v661 = vpack.c.b16 %v631, %v628
        %v662 = vpack.c.b16 %v632, %v629
        %v663 = vpack.c.b16 %v636, %v633
        %v664 = vpack.c.b16 %v637, %v634
        %v665 = vpack.c.b16 %v638, %v635
        %vm693 = vcmask 130048
        %v695 = vsel %vm693, %v547, 0
        %697 = vmatpush.bf16.msra.mxu0 %v660
        %698 = vmatpush.bf16.msra.mxu0 %v657
        %699 = vmatpush.bf16.msra.mxu0 %v654
        %700 = vmatpush.bf16.msra.mxu0 %v651
        %701 = vmatpush.bf16.msra.mxu0 %v648
        %702 = vmatpush.bf16.msra.mxu0 %v645
        %703 = vmatpush.bf16.msra.mxu0 %v642
        %704 = vmatpush.bf16.msra.mxu0 %v639
        %705 = vmatmul.bf16.gmra.mxu0 %v546
        %v706 = vpop.f32.mrf.mxu0
        %v707 = vadd.f32 %v541, %v706
        %v708 = vpop.f32.mrf.mxu0
        %709 = vdwg.mxu0
        %710 = vmatpush.bf16.msra.mxu0 0
        %711 = vmatpush.bf16.msra.mxu0 0
        %712 = vmatpush.bf16.msra.mxu0 0
        %713 = vmatpush.bf16.msra.mxu0 0
        %714 = vmatpush.bf16.msra.mxu0 0
        %715 = vmatpush.bf16.msra.mxu0 0
        %716 = vmatpush.bf16.msra.mxu0 0
        %717 = vmatpush.bf16.msra.mxu0 %v663
        %718 = vmatmul.bf16.gmra.mxu0 %v695
        %v719 = vpop.f32.mrf.mxu0
        %v720 = vadd.f32 %v707, %v719
        %v721 = vpop.f32.mrf.mxu0
        %722 = vdwg.mxu0
        %723 = vmatpush.bf16.msra.mxu0 %v661
        %724 = vmatpush.bf16.msra.mxu0 %v658
        %725 = vmatpush.bf16.msra.mxu0 %v655
        %726 = vmatpush.bf16.msra.mxu0 %v652
        %727 = vmatpush.bf16.msra.mxu0 %v649
        %728 = vmatpush.bf16.msra.mxu0 %v646
        %729 = vmatpush.bf16.msra.mxu0 %v643
        %730 = vmatpush.bf16.msra.mxu0 %v640
        %731 = vmatmul.bf16.gmra.mxu0 %v546
        %v732 = vpop.f32.mrf.mxu0
        %v733 = vadd.f32 %v541, %v732
        %v734 = vpop.f32.mrf.mxu0
        %735 = vdwg.mxu0
        %736 = vmatpush.bf16.msra.mxu0 0
        %737 = vmatpush.bf16.msra.mxu0 0
        %738 = vmatpush.bf16.msra.mxu0 0
        %739 = vmatpush.bf16.msra.mxu0 0
        %740 = vmatpush.bf16.msra.mxu0 0
        %741 = vmatpush.bf16.msra.mxu0 0
        %742 = vmatpush.bf16.msra.mxu0 0
        %743 = vmatpush.bf16.msra.mxu0 %v664
        %744 = vmatmul.bf16.gmra.mxu0 %v695
        %v745 = vpop.f32.mrf.mxu0
        %v746 = vadd.f32 %v733, %v745
        %v747 = vpop.f32.mrf.mxu0
        %748 = vdwg.mxu0
        %749 = vmatpush.bf16.msra.mxu0 %v662
        %750 = vmatpush.bf16.msra.mxu0 %v659
        %751 = vmatpush.bf16.msra.mxu0 %v656
        %752 = vmatpush.bf16.msra.mxu0 %v653
        %753 = vmatpush.bf16.msra.mxu0 %v650
        %754 = vmatpush.bf16.msra.mxu0 %v647
        %755 = vmatpush.bf16.msra.mxu0 %v644
        %756 = vmatpush.bf16.msra.mxu0 %v641
        %757 = vmatmul.bf16.gmra.mxu0 %v546
        %v758 = vpop.f32.mrf.mxu0
        %v759 = vadd.f32 %v541, %v758
        %v760 = vpop.f32.mrf.mxu0
        %761 = vdwg.mxu0
        %762 = vmatpush.bf16.msra.mxu0 0
        %763 = vmatpush.bf16.msra.mxu0 0
        %764 = vmatpush.bf16.msra.mxu0 0
        %765 = vmatpush.bf16.msra.mxu0 0
        %766 = vmatpush.bf16.msra.mxu0 0
        %767 = vmatpush.bf16.msra.mxu0 0
        %768 = vmatpush.bf16.msra.mxu0 0
        %769 = vmatpush.bf16.msra.mxu0 %v665
        %770 = vmatmul.bf16.gmra.mxu0 %v695
        %v771 = vpop.f32.mrf.mxu0
        %v772 = vadd.f32 %v759, %v771
        %v773 = vpop.f32.mrf.mxu0
        %774 = vdwg.mxu0
        %v775 = vmax.f32 %v720, 0.0
        %v776 = vmax.f32 %v746, 0.0
        %v777 = vmax.f32 %v772, 0.0
        %778 = vst [vmem:[%s208] sm:$0xff] %v775
        %779 = vst [vmem:[%s208 + $0x8] sm:$0xff] %v776
        %780 = vst [vmem:[%s208 + $0x10] sm:$0xff] %v777
        %s781 = sand.u32 %s112, 1
        %s782 = scalar_lea.sflag [#allocation5], %s781
        %s783 = sand.u32 %s112, 1
        %s784 = smul.addr %s783, 24
        %s785 = scalar_lea.vmem [#allocation6], %s784
        // Predicated region
        $region37: #{tpu_custom_call.1} parent=31 // pred_check
          %p786 = pneg %p122
        $region38: #{tpu_custom_call.1} parent=31 // pred_check_branch
          %788 = sbr.rel (%p786) target = $region40
        $region39: #{tpu_custom_call.1} parent=31 // pred_region
          %s789 = smul.u32 3, %s25
          %791 = vsyncadd %s782, 0
          %s792 = smul.addr %s24, 3
          %s793 = sadd.s32 %s789, %s792
          %s794 = smul.addr %s793, 8
          %s795 = scalar_lea.hbm %s3, %s794
          %s797 = sshll.u32 %s785, 4
          %s798 = int_to_ptr.vmem [resolvable:$true] %s797
          %s799 = sshll.u32 %s795, 4
          %s800 = int_to_ptr.hbm [resolvable:$true] %s799
          %802 = dma.vmem_to_hbm [thread:$0]  %s798, 384, %s800, %s782
        $region40: #{tpu_custom_call.1} parent=31 // pred_fallthru
          _
      $region32: #{tpu_custom_call.1} parent=5 // pred_fallthru
        _
      %p803 = scmp.le.s32.totalorder 2, %s15
      // Predicated region
      $region41: #{tpu_custom_call.1} parent=5 // pred_check
        %p804 = pneg %p803
      $region42: #{tpu_custom_call.1} parent=5 // pred_check_branch
        %806 = sbr.rel (%p804) target = $region44
      $region43: #{tpu_custom_call.1} parent=5 // pred_region
        %s807 = ssub.s32 %s15, 2
        // Predicated region
        $region45: #{tpu_custom_call.1} parent=43 // pred_check
          %p808 = pneg %p128
        $region46: #{tpu_custom_call.1} parent=43 // pred_check_branch
          %810 = sbr.rel (%p808) target = $region48
        $region47: #{tpu_custom_call.1} parent=43 // pred_region
          %s811 = sand.u32 %s113, 1
          %s812 = scalar_lea.sflag [#allocation5], %s811
          %s813 = sand.u32 %s113, 1
          %s814 = smul.addr %s813, 24
          %s815 = scalar_lea.vmem [#allocation6], %s814
          %817 = dma.done %s812, 384
        $region48: #{tpu_custom_call.1} parent=43 // pred_fallthru
          _
      $region44: #{tpu_custom_call.1} parent=5 // pred_fallthru
        _
    $region6: #{tpu_custom_call.1} parent=1 // loop_footer
      %s19 = sadd.s32 1, %s15
    $region7: #{tpu_custom_call.1} parent=1 // loop_footer_branch
      %14 = sbr.rel target = $region3
    $region8: #{tpu_custom_call.1} parent=1 // loop_exit
      _
    %818 = vsyncpa [#allocation4], 1
    %s819 = scalar_lea.sflag [#allocation4], 1
    %820 = vsyncpa %s819, 1
    %821 = vsyncpa [#allocation5], 1
    %s822 = scalar_lea.sflag [#allocation5], 1
    %823 = vsyncpa %s822, 1

</llo_original>
